<compile_context>
chip_gen: v6e
topology: v6e:2x2x1
jax: 0.10.0
libtpu: 0.0.40
codegen_flags: <defaults>
</compile_context>

<pallas_src>
import functools

import jax
import jax.numpy as jnp
import numpy as np
from jax.experimental import pallas as pl
from jax.experimental.pallas import tpu as pltpu

STATS = 166          # stat dimensionality produced by compute_statistics in the module
SPAD = 256           # lane-dense padding: next multiple of 128 >= STATS
LOGIT_LANE = STATS   # padded lane that carries the head logit out of the kernel


# ------------------------------------------------------------------------ kernel math

def _record_stats(x_fp, p1, p2, offset, w_row, onehot):
    """Per-record math on a (F, SPAD) zero-padded record (time on lanes).

    Host-side folding:
      p1/p2  : projection rows with column scale (MAX_UNIT / MAX_DELAY), 1/T and
               inv_std = 1/(std + 1e-8) folded in
      offset : scalar_mean * inv_std, with -bias stashed at LOGIT_LANE
      w_row  : head weights, zero at padded lanes (no pad leakage into the logit)
      onehot : 1.0 at LOGIT_LANE, 0 elsewhere
    Returns (1, SPAD): lanes 0..165 = normed stats, lane LOGIT_LANE = logit + bias.
    """
    m1 = jnp.sum(x_fp, axis=1, keepdims=True)           # (F, 1)  lane reduce (XLU)
    m2 = jnp.sum(x_fp * x_fp, axis=1, keepdims=True)    # (F, 1)
    # VPU broadcast-FMA + XLU sublane reduce (no degenerate M=1 MXU matmul).
    normed = jnp.sum(m1 * p1 + m2 * p2, axis=0, keepdims=True) - offset   # (1, SPAD)
    logit = jnp.sum(normed * w_row, axis=-1, keepdims=True)               # (1, 1)
    return normed + logit * onehot


def sk_disc_single_kernel(packed_ref, out_ref, *, F):
    # packed_ref: (3F+3, SPAD) single slab = ONE input DMA:
    #   rows [0 : F)        record (features on sublanes, zero-padded time on lanes)
    #   rows [F : 3F)       folded projections p1 | p2
    #   rows [3F : 3F+3)    offset | w | onehot
    P = packed_ref[...]
    out_ref[...] = _record_stats(
        P[0:F], P[F:2 * F], P[2 * F:3 * F],
        P[3 * F:3 * F + 1], P[3 * F + 1:3 * F + 2], P[3 * F + 2:3 * F + 3])


def sk_disc_batched_kernel(x_ref, params_ref, out_ref, *, F):
    # x_ref: (1, F, SPAD) one record per grid step; params_ref: (2F+3, SPAD) shared
    # (constant block index -> stays resident across grid steps); out_ref: (1, 1, SPAD).
    P = params_ref[...]
    out_ref[0] = _record_stats(
        x_ref[0], P[0:F], P[F:2 * F],
        P[2 * F:2 * F + 1], P[2 * F + 1:2 * F + 2], P[2 * F + 2:2 * F + 3])


# ---------------------------------------------------------------------- host packing

def _pack_params(T, F, max_unit, max_delay, scalar_mean, scalar_std, proj1, proj2, w, b):
    """Fold MAX_UNIT/MAX_DELAY column scaling, 1/T, inv_std, mean and bias into a
    (2F+3, SPAD) constants slab (exact algebraic rewrite of the module's forward)."""
    S = STATS
    pad = SPAD - S
    scale_np = np.ones((F,), np.float32)
    scale_np[0] = np.float32(max_unit)
    scale_np[1] = np.float32(max_delay)
    scale = jnp.asarray(scale_np)

    inv_std = 1.0 / (scalar_std.astype(jnp.float32).reshape(S) + 1e-8)
    inv_t = jnp.float32(1.0 / T)
    col = inv_std * inv_t                                           # (S,)

    p1 = jnp.pad(proj1.astype(jnp.float32) * scale[:, None] * col[None, :],
                 ((0, 0), (0, pad)))                                # (F, SPAD)
    p2 = jnp.pad(proj2.astype(jnp.float32) * (scale * scale)[:, None] * col[None, :],
                 ((0, 0), (0, pad)))                                # (F, SPAD)

    b_s = jnp.asarray(b, jnp.float32).reshape(())
    offset = jnp.pad(scalar_mean.astype(jnp.float32).reshape(S) * inv_std, (0, pad))
    offset = offset.at[LOGIT_LANE].set(-b_s)      # (stats-offset) deposits +b at lane 166
    w_row = jnp.pad(w.astype(jnp.float32).reshape(S), (0, pad))     # zero pads: no leak
    onehot = jnp.zeros((SPAD,), jnp.float32).at[LOGIT_LANE].set(1.0)

    return jnp.concatenate([p1, p2, offset[None], w_row[None], onehot[None]], axis=0)


# -------------------------------------------------------------------------- wrappers

def sk_discriminator_forward(x_btf, max_unit, max_delay,
                             scalar_mean, scalar_std, proj1, proj2, w, b):
    """Single-record forward (matches the PyTorch module's batch-of-one forward)."""
    assert x_btf.shape[0] == 1
    T, F = x_btf.shape[1], x_btf.shape[2]
    assert T <= SPAD  # TODO(synk): tile long records over a grid axis (see header note).

    params = _pack_params(T, F, max_unit, max_delay, scalar_mean, scalar_std,
                          proj1, proj2, w, b)                       # (2F+3, SPAD)
    x_fp = jnp.pad(x_btf[0].astype(jnp.float32).T, ((0, 0), (0, SPAD - T)))  # (F, SPAD)
    packed = jnp.concatenate([x_fp, params], axis=0)                # (3F+3, SPAD), 1 DMA

    cost = pl.CostEstimate(flops=int(8 * F * SPAD), transcendentals=0,
                           bytes_accessed=int((packed.size + SPAD) * 4))

    out = pl.pallas_call(
        functools.partial(sk_disc_single_kernel, F=F),
        out_shape=jax.ShapeDtypeStruct((1, SPAD), jnp.float32),
        in_specs=[pl.BlockSpec(memory_space=pltpu.MemorySpace.VMEM)],
        out_specs=pl.BlockSpec(memory_space=pltpu.MemorySpace.VMEM),
        cost_estimate=cost,
    )(packed)

    normed_stats = out[:, :STATS]                                   # (1, 166)
    pred = (out[0, LOGIT_LANE] > 0.0).astype(jnp.float32).reshape(1, 1)
    return pred, normed_stats


def sk_discriminator_forward_batched(x_btf, max_unit, max_delay,
                                     scalar_mean, scalar_std, proj1, proj2, w, b):
    """Batched forward: grid over records ('parallel' -> sharded across v7x's two TCs)."""
    B, T, F = x_btf.shape
    assert T <= SPAD  # TODO(synk): tile long records over a grid axis (see header note).

    params = _pack_params(T, F, max_unit, max_delay, scalar_mean, scalar_std,
                          proj1, proj2, w, b)                       # (2F+3, SPAD)
    x_fp = jnp.pad(jnp.transpose(x_btf.astype(jnp.float32), (0, 2, 1)),
                   ((0, 0), (0, 0), (0, SPAD - T)))                 # (B, F, SPAD)

    cost = pl.CostEstimate(flops=int(8 * F * SPAD * B), transcendentals=0,
                           bytes_accessed=int((x_fp.size + params.size + B * SPAD) * 4))

    out = pl.pallas_call(
        functools.partial(sk_disc_batched_kernel, F=F),
        out_shape=jax.ShapeDtypeStruct((B, 1, SPAD), jnp.float32),
        grid=(B,),
        in_specs=[
            pl.BlockSpec((1, F, SPAD), lambda i: (i, 0, 0)),        # one record per step
            pl.BlockSpec((2 * F + 3, SPAD), lambda i: (0, 0)),      # shared constants
        ],
        out_specs=pl.BlockSpec((1, 1, SPAD), lambda i: (i, 0, 0)),
        compiler_params=pltpu.CompilerParams(dimension_semantics=("parallel",)),
        cost_estimate=cost,
    )(x_fp, params)

    out2 = out[:, 0, :]
    normed_stats = out2[:, :STATS]                                  # (B, 166)
    pred = (out2[:, LOGIT_LANE] > 0.0).astype(jnp.float32).reshape(B, 1)
    return pred, normed_stats


# ---------------------------------------------------------------- pure-JAX reference

def _ref_forward(x_btf, max_unit, max_delay, scalar_mean, scalar_std, proj1, proj2, w, b):
    x = x_btf.astype(jnp.float32)
    scale = jnp.ones((x.shape[-1],), jnp.float32).at[0].set(max_unit).at[1].set(max_delay)
    xs = x * scale
    m1 = jnp.mean(xs, axis=1)                                       # (B, F)
    m2 = jnp.mean(xs * xs, axis=1)                                  # (B, F)
    stats = m1 @ proj1 + m2 @ proj2                                 # (B, 166)
    normed = (stats - scalar_mean) / (scalar_std + 1e-8)
    logit = normed @ w.reshape(STATS, 1) + jnp.asarray(b, jnp.float32).reshape(())
    pred = (logit > 0.0).astype(jnp.float32)
    return pred, normed


if __name__ == "__main__":
    key = jax.random.PRNGKey(0)
    k_x, k_xb, k_m, k_s, k_p1, k_p2, k_w, k_b = jax.random.split(key, 8)

    # Small shapes consistent with the module: records of length T=8 with F=4 features
    # (columns 0 and 1 are the "unit" and "delay" channels scaled in forward()).
    T, F, B = 8, 4, 8
    MAX_UNIT, MAX_DELAY = 10.0, 50.0

    X1 = jax.random.uniform(k_x, (1, T, F), dtype=jnp.float32)      # single record (B=1)
    XB = jax.random.uniform(k_xb, (B, T, F), dtype=jnp.float32)     # batched records

    # Deterministic stand-ins for np.load(scalar): mean/std over the 166 stats.
    scalar_mean = jax.random.normal(k_m, (STATS,), dtype=jnp.float32)
    scalar_std = jax.random.uniform(k_s, (STATS,), dtype=jnp.float32) + 0.5

    # Deterministic surrogate parameters (see TODO(synk) notes above).
    proj1 = jax.random.normal(k_p1, (F, STATS), dtype=jnp.float32) * 0.1
    proj2 = jax.random.normal(k_p2, (F, STATS), dtype=jnp.float32) * 0.1
    w = jax.random.normal(k_w, (STATS, 1), dtype=jnp.float32) * 0.1
    b = jax.random.normal(k_b, (1, 1), dtype=jnp.float32) * 0.1

    args = (MAX_UNIT, MAX_DELAY, scalar_mean, scalar_std, proj1, proj2, w, b)

    # Single-record path (module semantics, no grid, one packed input DMA).
    pred1, normed1 = sk_discriminator_forward(X1, *args)
    # Batched path (parallel grid over records).
    predB, normedB = sk_discriminator_forward_batched(XB, *args)
    jax.block_until_ready((pred1, normed1, predB, normedB))

    assert pred1.shape == (1, 1) and normed1.shape == (1, STATS)
    assert predB.shape == (B, 1) and normedB.shape == (B, STATS)
    assert bool(jnp.all(jnp.isfinite(normed1))) and bool(jnp.all(jnp.isfinite(normedB)))

    # Verify the host-side constant folding against a plain-JAX reference.
    _, ref1 = _ref_forward(X1, *args)
    _, refB = _ref_forward(XB, *args)
    np.testing.assert_allclose(np.asarray(normed1), np.asarray(ref1), rtol=1e-3, atol=1e-3)
    np.testing.assert_allclose(np.asarray(normedB), np.asarray(refB), rtol=1e-3, atol=1e-3)

    print("KERNEL_OK")
</pallas_src>

<mosaic_0001>
module attributes {stable_mosaic.version = 11 : i64} {
  func.func @sk_disc_single_kernel(%arg0: memref<15x256xf32, #tpu.memory_space<vmem>>, %arg1: memref<1x256xf32, #tpu.memory_space<vmem>>) attributes {dimension_semantics = [], scalar_prefetch = 0 : i64, scratch_operands = 0 : i64, tpu.core_type = #tpu.core_type<tc>} {
    %c0 = arith.constant 0 : index
    %c0_0 = arith.constant 0 : index
    %0 = vector.load %arg0[%c0, %c0_0] : memref<15x256xf32, #tpu.memory_space<vmem>>, vector<15x256xf32>
    %1 = vector.extract_strided_slice %0 {offsets = [0, 0], sizes = [4, 256], strides = [1, 1]} : vector<15x256xf32> to vector<4x256xf32>
    %2 = vector.extract_strided_slice %0 {offsets = [4, 0], sizes = [4, 256], strides = [1, 1]} : vector<15x256xf32> to vector<4x256xf32>
    %3 = vector.extract_strided_slice %0 {offsets = [8, 0], sizes = [4, 256], strides = [1, 1]} : vector<15x256xf32> to vector<4x256xf32>
    %4 = vector.extract_strided_slice %0 {offsets = [12, 0], sizes = [1, 256], strides = [1, 1]} : vector<15x256xf32> to vector<1x256xf32>
    %5 = vector.extract_strided_slice %0 {offsets = [13, 0], sizes = [1, 256], strides = [1, 1]} : vector<15x256xf32> to vector<1x256xf32>
    %6 = vector.extract_strided_slice %0 {offsets = [14, 0], sizes = [1, 256], strides = [1, 1]} : vector<15x256xf32> to vector<1x256xf32>
    %cst = arith.constant dense<0.000000e+00> : vector<4xf32>
    %7 = vector.multi_reduction <add>, %1, %cst [1] : vector<4x256xf32> to vector<4xf32>
    %8 = vector.shape_cast %7 : vector<4xf32> to vector<4x1xf32>
    %9 = arith.mulf %1, %1 : vector<4x256xf32>
    %cst_1 = arith.constant dense<0.000000e+00> : vector<4xf32>
    %10 = vector.multi_reduction <add>, %9, %cst_1 [1] : vector<4x256xf32> to vector<4xf32>
    %11 = vector.shape_cast %10 : vector<4xf32> to vector<4x1xf32>
    %12 = vector.broadcast %8 : vector<4x1xf32> to vector<4x256xf32>
    %13 = arith.mulf %12, %2 : vector<4x256xf32>
    %14 = vector.broadcast %11 : vector<4x1xf32> to vector<4x256xf32>
    %15 = arith.mulf %14, %3 : vector<4x256xf32>
    %16 = arith.addf %13, %15 : vector<4x256xf32>
    %cst_2 = arith.constant dense<0.000000e+00> : vector<256xf32>
    %17 = vector.multi_reduction <add>, %16, %cst_2 [0] : vector<4x256xf32> to vector<256xf32>
    %18 = vector.shape_cast %17 : vector<256xf32> to vector<1x256xf32>
    %19 = arith.subf %18, %4 : vector<1x256xf32>
    %20 = arith.mulf %19, %5 : vector<1x256xf32>
    %cst_3 = arith.constant dense<0.000000e+00> : vector<1xf32>
    %21 = vector.multi_reduction <add>, %20, %cst_3 [1] : vector<1x256xf32> to vector<1xf32>
    %22 = vector.shape_cast %21 : vector<1xf32> to vector<1x1xf32>
    %23 = vector.broadcast %22 : vector<1x1xf32> to vector<1x256xf32>
    %24 = arith.mulf %23, %6 : vector<1x256xf32>
    %25 = arith.addf %19, %24 : vector<1x256xf32>
    %c0_4 = arith.constant 0 : index
    %c0_5 = arith.constant 0 : index
    %26 = vector.load %arg1[%c0_4, %c0_5] : memref<1x256xf32, #tpu.memory_space<vmem>>, vector<1x256xf32>
    tpu.vector_store %arg1[%c0_4, %c0_5], %25 {strides = array<i32>} : memref<1x256xf32, #tpu.memory_space<vmem>>, vector<1x256xf32>,
    return
  }
}

</mosaic_0001>

<llo_original>
// kernel: tpu_custom_call.1
$region0: #{tpu_custom_call.1}
  #allocation0 [shape = 'u32[]', space=smem, size = 0x4, offset = 0x4, fixed_abs, tag = 'smem constant byte address 0x4 - core index']
  #allocation1 [shape = 'u32[144,128]{1,0:T(1,128)}', space=vmem, size = 0x12000, scoped, tag = 'internal scratch']
  %s0 = inlined_call_operand.hbm [shape: f32[15,256], index: 0, kind: input, shape index: {}]
  %s1 = inlined_call_operand.hbm [shape: f32[1,256], index: 1, kind: output, shape index: {}]
  %s2 = sld [smem:[#allocation0]]
  $region18: #{tpu_custom_call.1} parent=0
    _
  %s4 = ssub.s32 1, %s2
  %s5 = scalar_select 0, %s4, %s2
  $region1: #{tpu_custom_call.1} parent=0
    #allocation2 [shape = 'u8[16384]{0}', space=vmem, size = 0x4000, scoped, tag = 'input window, operand 0, single buffered']
    #allocation3 [shape = 's32[1]{0}', space=sflag, size = 0x4, scoped, tag = 'scoped memory for tpu_custom_call.1']
    #allocation4 [shape = 's32[1]{0}', space=sflag, size = 0x4, scoped, tag = 'scoped memory for tpu_custom_call.1']
    #allocation5 [shape = 'u8[1024]{0}', space=vmem, size = 0x400, scoped, tag = 'output window, operand 0, single buffered']
    %6 = vsyncpa [#allocation3], 0
    %7 = vsyncpa [#allocation4], 0
    // Predicated region
    $region2: #{tpu_custom_call.1} parent=1 // pred_check
      _
    $region3: #{tpu_custom_call.1} parent=1 // pred_check_branch
      %9 = sbr.rel (0) target = $region5
    $region4: #{tpu_custom_call.1} parent=1 // pred_region
      %s11 = ssub.s32 512, 512
      %12 = vsyncadd [#allocation3], %s11
      %s13 = sshll.u32 [#allocation2], 4
      %s14 = int_to_ptr.vmem [resolvable:$true] %s13
      %19 = dma.hbm_to_vmem [thread:$0]  %s0, 512, %s14, [#allocation3], 256, 256, 16
    $region5: #{tpu_custom_call.1} parent=1 // pred_fallthru
      _
    // Predicated region
    $region6: #{tpu_custom_call.1} parent=1 // pred_check
      _
    $region7: #{tpu_custom_call.1} parent=1 // pred_check_branch
      %21 = sbr.rel (0) target = $region9
    $region8: #{tpu_custom_call.1} parent=1 // pred_region
      %22 = dma.done [#allocation3], 512
    $region9: #{tpu_custom_call.1} parent=1 // pred_fallthru
      _
    %v23 = vld [vmem:[#allocation2] sm:$0xff]
    %v24 = vld [vmem:[#allocation2 + $0x8] sm:$0xff]
    %v25 = vld [vmem:[#allocation2 + $0x10] sm:$0x7f]
    %v26 = vld [vmem:[#allocation2 + $0x18] sm:$0x7f]
    %vm27 = vcmask 1043456
    %v28 = vsel %vm27, %v23, 0.0
    %v29 = vsel %vm27, %v24, 0.0
    %v30 = vadd.f32 %v28, %v29
    %31 = vadd.xlane.f32.xlu0 %v30
    %v32 = vpop.xlane.xlu0 %31
    %v33 = vmul.f32 %v23, %v23
    %v34 = vmul.f32 %v24, %v24
    %v35 = vsel %vm27, %v33, 0.0
    %v36 = vsel %vm27, %v34, 0.0
    %v37 = vadd.f32 %v35, %v36
    %38 = vadd.xlane.f32.xlu0 %v37
    %v39 = vpop.xlane.xlu0 %38
    %v42 = vrot.slane %v23, 4
    %v43 = vrot.slane %v24, 4
    %v46 = vmul.f32 %v32, %v42
    %v47 = vmul.f32 %v32, %v43
    %v48 = vmul.f32 %v39, %v25
    %v49 = vmul.f32 %v39, %v26
    %v50 = vadd.f32 %v46, %v48
    %v51 = vadd.f32 %v47, %v49
    %v52 = vsel %vm27, %v50, 0.0
    %v53 = vrot.slane %v52, 4
    %v54 = vadd.f32 %v52, %v53
    %v55 = vrot.slane %v54, 2
    %v56 = vadd.f32 %v54, %v55
    %v57 = vrot.slane %v56, 1
    %v58 = vadd.f32 %v56, %v57
    %v59 = vsel %vm27, %v51, 0.0
    %v60 = vrot.slane %v59, 4
    %v61 = vadd.f32 %v59, %v60
    %v62 = vrot.slane %v61, 2
    %v63 = vadd.f32 %v61, %v62
    %v64 = vrot.slane %v63, 1
    %v65 = vadd.f32 %v63, %v64
    %v66 = vsub.f32 %v58, %v25
    %v67 = vsub.f32 %v65, %v26
    %v70 = vrot.slane %v25, 1
    %v71 = vrot.slane %v26, 1
    %v74 = vmul.f32 %v66, %v70
    %v75 = vmul.f32 %v67, %v71
    %vm76 = vcmask 1044484
    %v77 = vsel %vm76, %v74, 0.0
    %v78 = vsel %vm76, %v75, 0.0
    %v79 = vadd.f32 %v77, %v78
    %80 = vadd.xlane.f32.xlu0 %v79
    %v81 = vpop.xlane.xlu0 %80
    %v82 = vrot.slane %v25, 2
    %v83 = vrot.slane %v26, 2
    %v86 = vmul.f32 %v81, %v82
    %v87 = vmul.f32 %v81, %v83
    %v88 = vadd.f32 %v66, %v86
    %v89 = vadd.f32 %v67, %v87
    %v92 = vcombine.high %v88, %v89
    %v94 = vunpack.c.l.s4 1966171168
    %v95 = vunpack.c.0.s8 %v94
    %v96 = vlaneseq
    %v97 = vshrl.u32 %v96, 7
    %v98 = vsub.s32 %v95, %v97
    %v99 = vrot.slane %v92, %v98
    %v101 = vunpack.c.l.s4 1966171168
    %v102 = vunpack.c.0.s8 %v101
    %v103 = vlaneseq
    %v104 = vshrl.u32 %v103, 7
    %v105 = vsub.s32 %v102, %v104
    %v106 = vrot.slane %v99, %v105
    %v108 = vlaneseq
    %vm109 = vcmp.ge.s32.totalorder %v108, 0
    %vm110 = vcmp.lt.s32.totalorder %v108, 256
    %vm111 = vmand %vm109, %vm110
    %112 = vst.msk [vmem:[#allocation5] sm:$0x3] %vm111, %v106
    // Predicated region
    $region10: #{tpu_custom_call.1} parent=1 // pred_check
      _
    $region11: #{tpu_custom_call.1} parent=1 // pred_check_branch
      %114 = sbr.rel (0) target = $region13
    $region12: #{tpu_custom_call.1} parent=1 // pred_region
      %s116 = ssub.s32 32, 32
      %117 = vsyncadd [#allocation4], %s116
      %s119 = sshll.u32 [#allocation5], 4
      %s120 = int_to_ptr.vmem [resolvable:$true] %s119
      %122 = dma.vmem_to_hbm [thread:$0]  %s120, 32, %s1, [#allocation4]
    $region13: #{tpu_custom_call.1} parent=1 // pred_fallthru
      _
    // Predicated region
    $region14: #{tpu_custom_call.1} parent=1 // pred_check
      _
    $region15: #{tpu_custom_call.1} parent=1 // pred_check_branch
      %124 = sbr.rel (0) target = $region17
    $region16: #{tpu_custom_call.1} parent=1 // pred_region
      %125 = dma.done [#allocation4], 32
    $region17: #{tpu_custom_call.1} parent=1 // pred_fallthru
      _
    %126 = vsyncpa [#allocation3], 1
    %127 = vsyncpa [#allocation4], 1

</llo_original>
